<compile_context>
chip_gen: v7x
topology: tpu7x:2x2x1
jax: 0.10.0
libtpu: 0.0.40
codegen_flags: <defaults>
</compile_context>

<pallas_src>
import jax
import jax.numpy as jnp
from jax.experimental import pallas as pl
from jax.experimental.pallas import tpu as pltpu

HIDDEN = 256


def _round_up(x, m):
    return ((x + m - 1) // m) * m


def align_kernel(x_ref, w1_ref, b1_ref, w2_ref, b2_ref, o_ref):
    # fc1: [TB, Dp] @ [Dp, H] + [1, H]   (f32 accumulation on the MXU)
    h = jnp.dot(x_ref[...], w1_ref[...], preferred_element_type=jnp.float32)
    h = h + b1_ref[...]
    # fc2: [TB, H] @ [H, Dp] + [1, Dp]
    y = jnp.dot(h.astype(w2_ref.dtype), w2_ref[...],
                preferred_element_type=jnp.float32)
    y = y + b2_ref[...]
    o_ref[...] = y.astype(o_ref.dtype)


def align_net(x, w1, b1, w2, b2):
    """x: [B, D]; w1: [D, H]; b1: [1, H]; w2: [H, D]; b2: [1, D]."""
    B, D = x.shape
    H = w1.shape[1]
    assert w1.shape == (D, H) and w2.shape == (H, D)
    assert b1.shape == (1, H) and b2.shape == (1, D)
    dtype = x.dtype

    # ---- layout: lane-dense feature dim, sublane-aligned batch tile --------
    Dp = _round_up(D, 128)                       # full 128-lane stores/loads
    TB = 256 if B >= 256 else _round_up(B, 8)    # MXU-height tile, sublane ok
    Bp = _round_up(B, TB)

    if Dp != D or Bp != B:
        x_p = jnp.pad(x, ((0, Bp - B), (0, Dp - D)))
        w1_p = jnp.pad(w1, ((0, Dp - D), (0, 0)))      # zero rows: no effect
        w2_p = jnp.pad(w2, ((0, 0), (0, Dp - D)))      # zero cols: pad out = 0
        b2_p = jnp.pad(b2, ((0, 0), (0, Dp - D)))
    else:
        x_p, w1_p, w2_p, b2_p = x, w1, w2, b2
    b1_p = b1

    grid = (pl.cdiv(Bp, TB),)

    # ---- VMEM budget: tiles + resident weights, clamped for v7x (64 MiB) ---
    elt = jnp.dtype(dtype).itemsize
    tile_bytes = elt * (
        4 * TB * Dp                 # double-buffered x + out tiles
        + TB * H                    # fc1 intermediate
        + 2 * (Dp * H + H + H * Dp + Dp)  # (double-buffered) weights/biases
    )
    vmem_limit = int(min(max(2 * tile_bytes, 32 << 20), 64 << 20))

    cost = pl.CostEstimate(
        flops=4 * Bp * H * Dp,
        transcendentals=0,
        bytes_accessed=elt * (2 * Bp * Dp + 2 * Dp * H + H + Dp),
    )

    out_p = pl.pallas_call(
        align_kernel,
        out_shape=jax.ShapeDtypeStruct((Bp, Dp), dtype),
        grid_spec=pltpu.PrefetchScalarGridSpec(
            num_scalar_prefetch=0,
            grid=grid,
            in_specs=[
                pl.BlockSpec((TB, Dp), lambda i: (i, 0)),   # x: tiled over batch
                pl.BlockSpec((Dp, H), lambda i: (0, 0)),    # w1: resident
                pl.BlockSpec((1, H), lambda i: (0, 0)),     # b1: resident
                pl.BlockSpec((H, Dp), lambda i: (0, 0)),    # w2: resident
                pl.BlockSpec((1, Dp), lambda i: (0, 0)),    # b2: resident
            ],
            out_specs=pl.BlockSpec((TB, Dp), lambda i: (i, 0)),
        ),
        compiler_params=pltpu.CompilerParams(
            dimension_semantics=("parallel",),   # megacore-sharded on v7x
            vmem_limit_bytes=vmem_limit,
        ),
        cost_estimate=cost,
    )(x_p, w1_p, b1_p, w2_p, b2_p)

    return out_p[:B, :D]


def init_params(key, embedding_dim, hidden=HIDDEN, dtype=jnp.float32):
    """Deterministic init mimicking nn.Linear's uniform(-1/sqrt(fan_in), +)."""
    k1, k2, k3, k4 = jax.random.split(key, 4)
    lim1 = 1.0 / (embedding_dim ** 0.5)
    lim2 = 1.0 / (hidden ** 0.5)
    # Stored already transposed relative to PyTorch's [out, in] convention.
    w1 = jax.random.uniform(k1, (embedding_dim, hidden), dtype, -lim1, lim1)
    b1 = jax.random.uniform(k2, (1, hidden), dtype, -lim1, lim1)
    w2 = jax.random.uniform(k3, (hidden, embedding_dim), dtype, -lim2, lim2)
    b2 = jax.random.uniform(k4, (1, embedding_dim), dtype, -lim2, lim2)
    return w1, b1, w2, b2


if __name__ == "__main__":
    key = jax.random.PRNGKey(0)
    kx, kp = jax.random.split(key)

    # Small, but large enough to exercise multiple batch tiles + padding paths
    # (B=300 -> TB=256, Bp=512, grid=(2,); D=32 -> Dp=128 lane-dense).
    batch = 300
    embedding_dim = 32

    x = jax.random.normal(kx, (batch, embedding_dim), dtype=jnp.float32)
    w1, b1, w2, b2 = init_params(kp, embedding_dim)

    out = align_net(x, w1, b1, w2, b2)
    out = jax.block_until_ready(out)

    # Reference check in plain JAX (same math as the PyTorch forward).
    ref = (x @ w1 + b1) @ w2 + b2
    assert out.shape == (batch, embedding_dim)
    assert jnp.allclose(out, ref, atol=1e-4, rtol=1e-4)

    print("KERNEL_OK")
</pallas_src>

<mosaic_0001>
module attributes {stable_mosaic.version = 11 : i64} {
  func.func @align_kernel(%arg0: i32, %arg1: memref<256x128xf32, #tpu.memory_space<vmem>>, %arg2: memref<128x256xf32, #tpu.memory_space<vmem>>, %arg3: memref<1x256xf32, #tpu.memory_space<vmem>>, %arg4: memref<256x128xf32, #tpu.memory_space<vmem>>, %arg5: memref<1x128xf32, #tpu.memory_space<vmem>>, %arg6: memref<256x128xf32, #tpu.memory_space<vmem>>) attributes {dimension_semantics = [#tpu.dimension_semantics<parallel>], iteration_bounds = array<i64: 2>, scalar_prefetch = 0 : i64, scratch_operands = 0 : i64, tpu.core_type = #tpu.core_type<tc>, window_params = [{transform_indices = @transform_0, window_bounds = array<i64: 256, 128>}, {pipeline_mode = #tpu.pipeline_mode<synchronous>, transform_indices = @transform_1, window_bounds = array<i64: 128, 256>}, {pipeline_mode = #tpu.pipeline_mode<synchronous>, transform_indices = @transform_2, window_bounds = array<i64: 1, 256>}, {pipeline_mode = #tpu.pipeline_mode<synchronous>, transform_indices = @transform_3, window_bounds = array<i64: 256, 128>}, {pipeline_mode = #tpu.pipeline_mode<synchronous>, transform_indices = @transform_4, window_bounds = array<i64: 1, 128>}, {transform_indices = @transform_5, window_bounds = array<i64: 256, 128>}]} {
    %c0 = arith.constant 0 : index
    %c0_0 = arith.constant 0 : index
    %0 = vector.load %arg1[%c0, %c0_0] : memref<256x128xf32, #tpu.memory_space<vmem>>, vector<256x128xf32>
    %c0_1 = arith.constant 0 : index
    %c0_2 = arith.constant 0 : index
    %1 = vector.load %arg2[%c0_1, %c0_2] : memref<128x256xf32, #tpu.memory_space<vmem>>, vector<128x256xf32>
    %cst = arith.constant dense<0.000000e+00> : vector<256x256xf32>
    %2 = tpu.matmul %0, %1, %cst {dimension_numbers = #tpu.dot_dimension_numbers<[1], [0], [0], [1], [0, 0, 1, 1], [], []>} : vector<256x128xf32>, vector<128x256xf32>, vector<256x256xf32> -> vector<256x256xf32>
    %c0_3 = arith.constant 0 : index
    %c0_4 = arith.constant 0 : index
    %3 = vector.load %arg3[%c0_3, %c0_4] : memref<1x256xf32, #tpu.memory_space<vmem>>, vector<1x256xf32>
    %4 = vector.broadcast %3 : vector<1x256xf32> to vector<256x256xf32>
    %5 = arith.addf %2, %4 : vector<256x256xf32>
    %c0_5 = arith.constant 0 : index
    %c0_6 = arith.constant 0 : index
    %6 = vector.load %arg4[%c0_5, %c0_6] : memref<256x128xf32, #tpu.memory_space<vmem>>, vector<256x128xf32>
    %cst_7 = arith.constant dense<0.000000e+00> : vector<256x128xf32>
    %7 = tpu.matmul %5, %6, %cst_7 {dimension_numbers = #tpu.dot_dimension_numbers<[1], [0], [0], [1], [0, 0, 1, 1], [], []>} : vector<256x256xf32>, vector<256x128xf32>, vector<256x128xf32> -> vector<256x128xf32>
    %c0_8 = arith.constant 0 : index
    %c0_9 = arith.constant 0 : index
    %8 = vector.load %arg5[%c0_8, %c0_9] : memref<1x128xf32, #tpu.memory_space<vmem>>, vector<1x128xf32>
    %9 = vector.broadcast %8 : vector<1x128xf32> to vector<256x128xf32>
    %10 = arith.addf %7, %9 : vector<256x128xf32>
    %c0_10 = arith.constant 0 : index
    %c0_11 = arith.constant 0 : index
    %11 = vector.load %arg6[%c0_10, %c0_11] : memref<256x128xf32, #tpu.memory_space<vmem>>, vector<256x128xf32>
    tpu.vector_store %arg6[%c0_10, %c0_11], %10 {strides = array<i32>} : memref<256x128xf32, #tpu.memory_space<vmem>>, vector<256x128xf32>,
    return
  }
  func.func @transform_0(%arg0: i32) -> (i32, i32) {
    %c0_i32 = arith.constant 0 : i32
    %c0_i32_0 = arith.constant 0 : i32
    return %arg0, %c0_i32 : i32, i32
  }
  func.func @transform_1(%arg0: i32) -> (i32, i32) {
    %c0_i32 = arith.constant 0 : i32
    %c0_i32_0 = arith.constant 0 : i32
    %c0_i32_1 = arith.constant 0 : i32
    return %c0_i32, %c0_i32_0 : i32, i32
  }
  func.func @transform_2(%arg0: i32) -> (i32, i32) {
    %c0_i32 = arith.constant 0 : i32
    %c0_i32_0 = arith.constant 0 : i32
    %c0_i32_1 = arith.constant 0 : i32
    return %c0_i32, %c0_i32_0 : i32, i32
  }
  func.func @transform_3(%arg0: i32) -> (i32, i32) {
    %c0_i32 = arith.constant 0 : i32
    %c0_i32_0 = arith.constant 0 : i32
    %c0_i32_1 = arith.constant 0 : i32
    return %c0_i32, %c0_i32_0 : i32, i32
  }
  func.func @transform_4(%arg0: i32) -> (i32, i32) {
    %c0_i32 = arith.constant 0 : i32
    %c0_i32_0 = arith.constant 0 : i32
    %c0_i32_1 = arith.constant 0 : i32
    return %c0_i32, %c0_i32_0 : i32, i32
  }
  func.func @transform_5(%arg0: i32) -> (i32, i32) {
    %c0_i32 = arith.constant 0 : i32
    %c0_i32_0 = arith.constant 0 : i32
    return %arg0, %c0_i32 : i32, i32
  }
}

</mosaic_0001>

<llo_original>
// kernel: tpu_custom_call.1
$region0: #{tpu_custom_call.1}
  #allocation0 [shape = 'u32[]', space=smem, size = 0x4, offset = 0x4, fixed_abs, tag = 'smem constant byte address 0x4 - core index']
  #allocation1 [shape = 'u32[144,128]{1,0:T(1,128)}', space=vmem, size = 0x12000, scoped, tag = 'internal scratch']
  %s0 = inlined_call_operand.hbm [shape: f32[512,128], index: 0, kind: input, shape index: {}]
  %s1 = inlined_call_operand.hbm [shape: f32[128,256], index: 1, kind: input, shape index: {}]
  %s2 = inlined_call_operand.vmem [shape: f32[1,256], index: 2, kind: input, shape index: {}]
  %s3 = inlined_call_operand.hbm [shape: f32[256,128], index: 3, kind: input, shape index: {}]
  %s4 = inlined_call_operand.vmem [shape: f32[1,128], index: 4, kind: input, shape index: {}]
  %s5 = inlined_call_operand.hbm [shape: f32[512,128], index: 5, kind: output, shape index: {}]
  %s6 = sld [smem:[#allocation0]]
  $region65: #{tpu_custom_call.1} parent=0
    _
  %s8 = ssub.s32 1, %s6
  %s9 = scalar_select 0, %s8, %s6
  $region1: #{tpu_custom_call.1} parent=0
    #allocation2 [shape = 'u8[262144]{0}', space=vmem, size = 0x40000, scoped, tag = 'input window, operand 0']
    #allocation3 [shape = 's32[2]{0}', space=sflag, size = 0x8, scoped, tag = 'scoped memory for tpu_custom_call.1']
    #allocation4 [shape = 's32[2]{0}', space=sflag, size = 0x8, scoped, tag = 'scoped memory for tpu_custom_call.1']
    #allocation5 [shape = 'u8[131072]{0}', space=vmem, size = 0x20000, scoped, tag = 'input window, operand 1, single buffered']
    #allocation6 [shape = 's32[1]{0}', space=sflag, size = 0x4, scoped, tag = 'scoped memory for tpu_custom_call.1']
    #allocation7 [shape = 'u8[131072]{0}', space=vmem, size = 0x20000, scoped, tag = 'input window, operand 3, single buffered']
    #allocation8 [shape = 'u8[262144]{0}', space=vmem, size = 0x40000, scoped, tag = 'output window, operand 0']
    %10 = vsyncpa [#allocation3], 0
    %s11 = scalar_lea.sflag [#allocation3], 1
    %12 = vsyncpa %s11, 0
    %13 = vsyncpa [#allocation6], 0
    %14 = vsyncpa [#allocation4], 0
    %s15 = scalar_lea.sflag [#allocation4], 1
    %16 = vsyncpa %s15, 0
    loop: start=0, step=1, limit=4
    $region2: #{tpu_custom_call.1} parent=1 // loop_pre_header
      _
    $region3: #{tpu_custom_call.1} parent=1 // loop_header
      %s18 = sphi 0, %s22
      %p19 = scmp.ge.s32.totalorder %s18, 4
      %s28 = sphi 0, %s30
      %s31 = sphi 0, %s28
      %s32 = sphi 0, %s31
      %s48 = sphi 0, %s32
      %s52 = sphi 0, %s52
      %s54 = sphi 0, %s52
      %s55 = sphi 0, %s54
      %s69 = sphi 0, %s55
      %s73 = sphi 0, %s73
      %s75 = sphi 0, %s73
      %s76 = sphi 0, %s75
      %s90 = sphi 0, %s76
      %s94 = sphi 0, %s94
      %s96 = sphi 0, %s94
      %s97 = sphi 0, %s96
      %s111 = sphi 0, %s97
      %s115 = sphi 0, %s115
      %s117 = sphi 0, %s115
      %s118 = sphi 0, %s117
      %s132 = sphi 0, %s118
      %s138 = sphi 0, %s140
      %s141 = sphi 0, %s138
      %s142 = sphi 0, %s141
      %s158 = sphi 0, %s142
    $region4: #{tpu_custom_call.1} parent=1 // loop_header_branch
      %21 = sbr.rel (%p19) target = $region8
    $region5: #{tpu_custom_call.1} parent=1 // loop_body
      %s23 = ssub.s32 %s18, 1
      %s24 = ssub.s32 %s18, 2
      %s25 = sadd.s32 %s18, 1
      %s26 = ssub.s32 %s18, %s25
      %p27 = scmp.eq.s32.totalorder %s26, 0
      %s29 = sadd.s32 %s28, 1
      %s30 = scalar_select %p27, %s28, %s29
      %p33 = pneg %p27
      %p34 = scmp.eq.s32.totalorder %s18, 1
      %p35 = por %p33, %p34
      %p36 = scmp.ne.s32.totalorder %s28, %s31
      %p37 = scmp.eq.s32.totalorder %s18, 0
      %p38 = por %p36, %p37
      %p39 = scmp.ne.s32.totalorder %s28, %s31
      %p40 = scmp.eq.s32.totalorder %s23, 1
      %p41 = por %p39, %p40
      %p42 = scmp.ne.s32.totalorder %s31, %s32
      %p43 = scmp.eq.s32.totalorder %s23, 0
      %p44 = por %p42, %p43
      %p45 = scmp.ne.s32.totalorder %s31, %s32
      %p46 = scmp.eq.s32.totalorder %s24, 1
      %p47 = por %p45, %p46
      %p49 = scmp.ne.s32.totalorder %s32, %s48
      %p50 = scmp.eq.s32.totalorder %s24, 0
      %p51 = por %p49, %p50
      %s53 = sadd.s32 %s52, 1
      %p56 = scmp.eq.s32.totalorder %s18, 1
      %p57 = scmp.ne.s32.totalorder %s52, %s54
      %p58 = scmp.eq.s32.totalorder %s18, 0
      %p59 = por %p57, %p58
      %p60 = scmp.ne.s32.totalorder %s52, %s54
      %p61 = scmp.eq.s32.totalorder %s23, 1
      %p62 = por %p60, %p61
      %p63 = scmp.ne.s32.totalorder %s54, %s55
      %p64 = scmp.eq.s32.totalorder %s23, 0
      %p65 = por %p63, %p64
      %p66 = scmp.ne.s32.totalorder %s54, %s55
      %p67 = scmp.eq.s32.totalorder %s24, 1
      %p68 = por %p66, %p67
      %p70 = scmp.ne.s32.totalorder %s55, %s69
      %p71 = scmp.eq.s32.totalorder %s24, 0
      %p72 = por %p70, %p71
      %s74 = sadd.s32 %s73, 1
      %p77 = scmp.eq.s32.totalorder %s18, 1
      %p78 = scmp.ne.s32.totalorder %s73, %s75
      %p79 = scmp.eq.s32.totalorder %s18, 0
      %p80 = por %p78, %p79
      %p81 = scmp.ne.s32.totalorder %s73, %s75
      %p82 = scmp.eq.s32.totalorder %s23, 1
      %p83 = por %p81, %p82
      %p84 = scmp.ne.s32.totalorder %s75, %s76
      %p85 = scmp.eq.s32.totalorder %s23, 0
      %p86 = por %p84, %p85
      %p87 = scmp.ne.s32.totalorder %s75, %s76
      %p88 = scmp.eq.s32.totalorder %s24, 1
      %p89 = por %p87, %p88
      %p91 = scmp.ne.s32.totalorder %s76, %s90
      %p92 = scmp.eq.s32.totalorder %s24, 0
      %p93 = por %p91, %p92
      %s95 = sadd.s32 %s94, 1
      %p98 = scmp.eq.s32.totalorder %s18, 1
      %p99 = scmp.ne.s32.totalorder %s94, %s96
      %p100 = scmp.eq.s32.totalorder %s18, 0
      %p101 = por %p99, %p100
      %p102 = scmp.ne.s32.totalorder %s94, %s96
      %p103 = scmp.eq.s32.totalorder %s23, 1
      %p104 = por %p102, %p103
      %p105 = scmp.ne.s32.totalorder %s96, %s97
      %p106 = scmp.eq.s32.totalorder %s23, 0
      %p107 = por %p105, %p106
      %p108 = scmp.ne.s32.totalorder %s96, %s97
      %p109 = scmp.eq.s32.totalorder %s24, 1
      %p110 = por %p108, %p109
      %p112 = scmp.ne.s32.totalorder %s97, %s111
      %p113 = scmp.eq.s32.totalorder %s24, 0
      %p114 = por %p112, %p113
      %s116 = sadd.s32 %s115, 1
      %p119 = scmp.eq.s32.totalorder %s18, 1
      %p120 = scmp.ne.s32.totalorder %s115, %s117
      %p121 = scmp.eq.s32.totalorder %s18, 0
      %p122 = por %p120, %p121
      %p123 = scmp.ne.s32.totalorder %s115, %s117
      %p124 = scmp.eq.s32.totalorder %s23, 1
      %p125 = por %p123, %p124
      %p126 = scmp.ne.s32.totalorder %s117, %s118
      %p127 = scmp.eq.s32.totalorder %s23, 0
      %p128 = por %p126, %p127
      %p129 = scmp.ne.s32.totalorder %s117, %s118
      %p130 = scmp.eq.s32.totalorder %s24, 1
      %p131 = por %p129, %p130
      %p133 = scmp.ne.s32.totalorder %s118, %s132
      %p134 = scmp.eq.s32.totalorder %s24, 0
      %p135 = por %p133, %p134
      %s136 = ssub.s32 %s18, %s25
      %p137 = scmp.eq.s32.totalorder %s136, 0
      %s139 = sadd.s32 %s138, 1
      %s140 = scalar_select %p137, %s138, %s139
      %p143 = pneg %p137
      %p144 = scmp.eq.s32.totalorder %s18, 1
      %p145 = por %p143, %p144
      %p146 = scmp.ne.s32.totalorder %s138, %s141
      %p147 = scmp.eq.s32.totalorder %s18, 0
      %p148 = por %p146, %p147
      %p149 = scmp.ne.s32.totalorder %s138, %s141
      %p150 = scmp.eq.s32.totalorder %s23, 1
      %p151 = por %p149, %p150
      %p152 = scmp.ne.s32.totalorder %s141, %s142
      %p153 = scmp.eq.s32.totalorder %s23, 0
      %p154 = por %p152, %p153
      %p155 = scmp.ne.s32.totalorder %s141, %s142
      %p156 = scmp.eq.s32.totalorder %s24, 1
      %p157 = por %p155, %p156
      %p159 = scmp.ne.s32.totalorder %s142, %s158
      %p160 = scmp.eq.s32.totalorder %s24, 0
      %p161 = por %p159, %p160
      %p162 = scmp.le.s32.totalorder 1, %s18
      %p163 = scmp.lt.s32.totalorder %s18, 3
      %p164 = pnand %p162, %p163
      %p165 = pneg %p164
      // Predicated region
      $region9: #{tpu_custom_call.1} parent=5 // pred_check
        _
      $region10: #{tpu_custom_call.1} parent=5 // pred_check_branch
        %167 = sbr.rel (%p164) target = $region12
      $region11: #{tpu_custom_call.1} parent=5 // pred_region
        %s168 = ssub.s32 %s18, 1
        // Predicated region
        $region13: #{tpu_custom_call.1} parent=11 // pred_check
          %p169 = pneg %p65
        $region14: #{tpu_custom_call.1} parent=11 // pred_check_branch
          %171 = sbr.rel (%p169) target = $region16
        $region15: #{tpu_custom_call.1} parent=11 // pred_region
          %s173 = ssub.s32 4096, 4096
          %174 = vsyncadd [#allocation6], %s173
          %s175 = sshll.u32 [#allocation5], 4
          %s176 = int_to_ptr.vmem [resolvable:$true] %s175
          %181 = dma.hbm_to_vmem [thread:$0]  %s1, 4096, %s176, [#allocation6], 256, 256, 16
        $region16: #{tpu_custom_call.1} parent=11 // pred_fallthru
          _
        // Predicated region
        $region17: #{tpu_custom_call.1} parent=11 // pred_check
          %p182 = pneg %p86
        $region18: #{tpu_custom_call.1} parent=11 // pred_check_branch
          %184 = sbr.rel (%p182) target = $region20
        $region19: #{tpu_custom_call.1} parent=11 // pred_region
          _
        $region20: #{tpu_custom_call.1} parent=11 // pred_fallthru
          _
        // Predicated region
        $region21: #{tpu_custom_call.1} parent=11 // pred_check
          %p185 = pneg %p107
        $region22: #{tpu_custom_call.1} parent=11 // pred_check_branch
          %187 = sbr.rel (%p185) target = $region24
        $region23: #{tpu_custom_call.1} parent=11 // pred_region
          %s189 = ssub.s32 4096, 4096
          %190 = vsyncadd [#allocation6], %s189
          %s191 = sshll.u32 [#allocation7], 4
          %s192 = int_to_ptr.vmem [resolvable:$true] %s191
          %197 = dma.hbm_to_vmem [thread:$0]  %s3, 4096, %s192, [#allocation6], 128, 128, 8
        $region24: #{tpu_custom_call.1} parent=11 // pred_fallthru
          _
        // Predicated region
        $region25: #{tpu_custom_call.1} parent=11 // pred_check
          %p198 = pneg %p128
        $region26: #{tpu_custom_call.1} parent=11 // pred_check_branch
          %200 = sbr.rel (%p198) target = $region28
        $region27: #{tpu_custom_call.1} parent=11 // pred_region
          _
        $region28: #{tpu_custom_call.1} parent=11 // pred_fallthru
          _
      $region12: #{tpu_custom_call.1} parent=5 // pred_fallthru
        _
      %p201 = scmp.lt.s32.totalorder %s18, 2
      // Predicated region
      $region29: #{tpu_custom_call.1} parent=5 // pred_check
        %p202 = pneg %p201
      $region30: #{tpu_custom_call.1} parent=5 // pred_check_branch
        %204 = sbr.rel (%p202) target = $region32
      $region31: #{tpu_custom_call.1} parent=5 // pred_region
        // Predicated region
        $region33: #{tpu_custom_call.1} parent=31 // pred_check
          %p205 = pneg %p38
        $region34: #{tpu_custom_call.1} parent=31 // pred_check_branch
          %207 = sbr.rel (%p205) target = $region36
        $region35: #{tpu_custom_call.1} parent=31 // pred_region
          %s208 = sand.u32 %s28, 1
          %s209 = scalar_lea.sflag [#allocation3], %s208
          %s210 = sand.u32 %s28, 1
          %s211 = smul.addr %s210, 256
          %s212 = scalar_lea.vmem [#allocation2], %s211
          %s213 = smul.u32 32, %s18
          %s215 = ssub.s32 4096, 4096
          %216 = vsyncadd %s209, %s215
          %s217 = smul.addr %s213, 128
          %s218 = scalar_lea.hbm %s0, %s217
          %s219 = sshll.u32 %s212, 4
          %s220 = int_to_ptr.vmem [resolvable:$true] %s219
          %225 = dma.hbm_to_vmem [thread:$0]  %s218, 4096, %s220, %s209, 128, 128, 8
        $region36: #{tpu_custom_call.1} parent=31 // pred_fallthru
          _
      $region32: #{tpu_custom_call.1} parent=5 // pred_fallthru
        _
      %p226 = scmp.le.s32.totalorder 1, %s18
      %p227 = scmp.lt.s32.totalorder %s18, 3
      %p228 = pnand %p226, %p227
      %p229 = pneg %p228
      // Predicated region
      $region37: #{tpu_custom_call.1} parent=5 // pred_check
        _
      $region38: #{tpu_custom_call.1} parent=5 // pred_check_branch
        %231 = sbr.rel (%p228) target = $region40
      $region39: #{tpu_custom_call.1} parent=5 // pred_region
        %s232 = ssub.s32 %s18, 1
        %s233 = sand.u32 %s31, 1
        %s234 = scalar_lea.sflag [#allocation3], %s233
        %s235 = sand.u32 %s31, 1
        %s236 = smul.addr %s235, 256
        %s237 = scalar_lea.vmem [#allocation2], %s236
        // Predicated region
        $region41: #{tpu_custom_call.1} parent=39 // pred_check
          %p238 = pneg %p44
        $region42: #{tpu_custom_call.1} parent=39 // pred_check_branch
          %240 = sbr.rel (%p238) target = $region44
        $region43: #{tpu_custom_call.1} parent=39 // pred_region
          %241 = dma.done %s234, 4096
        $region44: #{tpu_custom_call.1} parent=39 // pred_fallthru
          _
        // Predicated region
        $region45: #{tpu_custom_call.1} parent=39 // pred_check
          %p242 = pneg %p65
        $region46: #{tpu_custom_call.1} parent=39 // pred_check_branch
          %244 = sbr.rel (%p242) target = $region48
        $region47: #{tpu_custom_call.1} parent=39 // pred_region
          %245 = dma.done [#allocation6], 4096
        $region48: #{tpu_custom_call.1} parent=39 // pred_fallthru
          _
        // Predicated region
        $region49: #{tpu_custom_call.1} parent=39 // pred_check
          %p246 = pneg %p107
        $region50: #{tpu_custom_call.1} parent=39 // pred_check_branch
          %248 = sbr.rel (%p246) target = $region52
        $region51: #{tpu_custom_call.1} parent=39 // pred_region
          %249 = dma.done [#allocation6], 4096
        $region52: #{tpu_custom_call.1} parent=39 // pred_fallthru
          _
        %s250 = sand.u32 %s31, 1
        %s251 = scalar_lea.sflag [#allocation3], %s250
        %s252 = sand.u32 %s31, 1
        %s253 = smul.addr %s252, 256
        %s254 = scalar_lea.vmem [#allocation2], %s253
        %p255 = pneg %p44
        %p256 = pneg %p41
        %p257 = pneg %p65
        %p258 = pneg %p62
        %p259 = pneg %p86
        %p260 = pneg %p83
        %p261 = pneg %p107
        %p262 = pneg %p104
        %p263 = pneg %p128
        %p264 = pneg %p125
        %p265 = pneg %p154
        %p266 = pneg %p151
        %s267 = sand.u32 %s141, 1
        %s268 = scalar_lea.sflag [#allocation4], %s267
        %s269 = sand.u32 %s141, 1
        %s270 = smul.addr %s269, 256
        %s271 = scalar_lea.vmem [#allocation8], %s270
        %s272 = smul.u32 32, %s23
        %s273 = smul.u32 32, %s23
        %v274 = vld [vmem:[%s237] sm:$0xff]
        %v275 = vld [vmem:[%s237 + $0x8] sm:$0xff]
        %v276 = vld [vmem:[%s237 + $0x10] sm:$0xff]
        %v277 = vld [vmem:[%s237 + $0x18] sm:$0xff]
        %v278 = vld [vmem:[%s237 + $0x20] sm:$0xff]
        %v279 = vld [vmem:[%s237 + $0x28] sm:$0xff]
        %v280 = vld [vmem:[%s237 + $0x30] sm:$0xff]
        %v281 = vld [vmem:[%s237 + $0x38] sm:$0xff]
        %v282 = vld [vmem:[%s237 + $0x40] sm:$0xff]
        %v283 = vld [vmem:[%s237 + $0x48] sm:$0xff]
        %v284 = vld [vmem:[%s237 + $0x50] sm:$0xff]
        %v285 = vld [vmem:[%s237 + $0x58] sm:$0xff]
        %v286 = vld [vmem:[%s237 + $0x60] sm:$0xff]
        %v287 = vld [vmem:[%s237 + $0x68] sm:$0xff]
        %v288 = vld [vmem:[%s237 + $0x70] sm:$0xff]
        %v289 = vld [vmem:[%s237 + $0x78] sm:$0xff]
        %v290 = vld [vmem:[%s237 + $0x80] sm:$0xff]
        %v291 = vld [vmem:[%s237 + $0x88] sm:$0xff]
        %v292 = vld [vmem:[%s237 + $0x90] sm:$0xff]
        %v293 = vld [vmem:[%s237 + $0x98] sm:$0xff]
        %v294 = vld [vmem:[%s237 + $0xa0] sm:$0xff]
        %v295 = vld [vmem:[%s237 + $0xa8] sm:$0xff]
        %v296 = vld [vmem:[%s237 + $0xb0] sm:$0xff]
        %v297 = vld [vmem:[%s237 + $0xb8] sm:$0xff]
        %v298 = vld [vmem:[%s237 + $0xc0] sm:$0xff]
        %v299 = vld [vmem:[%s237 + $0xc8] sm:$0xff]
        %v300 = vld [vmem:[%s237 + $0xd0] sm:$0xff]
        %v301 = vld [vmem:[%s237 + $0xd8] sm:$0xff]
        %v302 = vld [vmem:[%s237 + $0xe0] sm:$0xff]
        %v303 = vld [vmem:[%s237 + $0xe8] sm:$0xff]
        %v304 = vld [vmem:[%s237 + $0xf0] sm:$0xff]
        %v305 = vld [vmem:[%s237 + $0xf8] sm:$0xff]
        %v306 = vld [vmem:[#allocation5] sm:$0xff]
        %v307 = vld [vmem:[#allocation5 + $0x8] sm:$0xff]
        %v308 = vld [vmem:[#allocation5 + $0x10] sm:$0xff]
        %v309 = vld [vmem:[#allocation5 + $0x18] sm:$0xff]
        %v310 = vld [vmem:[#allocation5 + $0x20] sm:$0xff]
        %v311 = vld [vmem:[#allocation5 + $0x28] sm:$0xff]
        %v312 = vld [vmem:[#allocation5 + $0x30] sm:$0xff]
        %v313 = vld [vmem:[#allocation5 + $0x38] sm:$0xff]
        %v314 = vld [vmem:[#allocation5 + $0x40] sm:$0xff]
        %v315 = vld [vmem:[#allocation5 + $0x48] sm:$0xff]
        %v316 = vld [vmem:[#allocation5 + $0x50] sm:$0xff]
        %v317 = vld [vmem:[#allocation5 + $0x58] sm:$0xff]
        %v318 = vld [vmem:[#allocation5 + $0x60] sm:$0xff]
        %v319 = vld [vmem:[#allocation5 + $0x68] sm:$0xff]
        %v320 = vld [vmem:[#allocation5 + $0x70] sm:$0xff]
        %v321 = vld [vmem:[#allocation5 + $0x78] sm:$0xff]
        %v322 = vld [vmem:[#allocation5 + $0x80] sm:$0xff]
        %v323 = vld [vmem:[#allocation5 + $0x88] sm:$0xff]
        %v324 = vld [vmem:[#allocation5 + $0x90] sm:$0xff]
        %v325 = vld [vmem:[#allocation5 + $0x98] sm:$0xff]
        %v326 = vld [vmem:[#allocation5 + $0xa0] sm:$0xff]
        %v327 = vld [vmem:[#allocation5 + $0xa8] sm:$0xff]
        %v328 = vld [vmem:[#allocation5 + $0xb0] sm:$0xff]
        %v329 = vld [vmem:[#allocation5 + $0xb8] sm:$0xff]
        %v330 = vld [vmem:[#allocation5 + $0xc0] sm:$0xff]
        %v331 = vld [vmem:[#allocation5 + $0xc8] sm:$0xff]
        %v332 = vld [vmem:[#allocation5 + $0xd0] sm:$0xff]
        %v333 = vld [vmem:[#allocation5 + $0xd8] sm:$0xff]
        %v334 = vld [vmem:[#allocation5 + $0xe0] sm:$0xff]
        %v335 = vld [vmem:[#allocation5 + $0xe8] sm:$0xff]
        %v336 = vld [vmem:[#allocation5 + $0xf0] sm:$0xff]
        %v337 = vld [vmem:[#allocation5 + $0xf8] sm:$0xff]
        %v338 = vld [vmem:[%s2] sm:$0x3]
        %v340 = vlaneseq
        %v341 = vshrl.u32 %v340, 7
        %v342 = vsub.s32 0, %v341
        %v343 = vrot.slane %v338, %v342
        %v344 = vlaneseq
        %v345 = vshrl.u32 %v344, 7
        %v346 = vsub.s32 1, %v345
        %v347 = vrot.slane %v338, %v346
        %350 = vmatprep.subr.mxu0 %v307
        %351 = vmatpush1.msra.mxu0 %v306
        %352 = vmatprep.subr.mxu0 %v309
        %353 = vmatpush1.msra.mxu0 %v308
        %354 = vmatprep.subr.mxu0 %v311
        %355 = vmatpush1.msra.mxu0 %v310
        %356 = vmatprep.subr.mxu0 %v313
        %357 = vmatpush1.msra.mxu0 %v312
        %358 = vmatprep.subr.mxu0 %v315
        %359 = vmatpush1.msra.mxu0 %v314
        %360 = vmatprep.subr.mxu0 %v317
        %361 = vmatpush1.msra.mxu0 %v316
        %362 = vmatprep.subr.mxu0 %v319
        %363 = vmatpush1.msra.mxu0 %v318
        %364 = vmatprep.subr.mxu0 %v321
        %365 = vmatpush1.msra.mxu0 %v320
        %366 = vmatprep.subr.mxu0 %v323
        %367 = vmatpush1.msra.mxu0 %v322
        %368 = vmatprep.subr.mxu0 %v325
        %369 = vmatpush1.msra.mxu0 %v324
        %370 = vmatprep.subr.mxu0 %v327
        %371 = vmatpush1.msra.mxu0 %v326
        %372 = vmatprep.subr.mxu0 %v329
        %373 = vmatpush1.msra.mxu0 %v328
        %374 = vmatprep.subr.mxu0 %v331
        %375 = vmatpush1.msra.mxu0 %v330
        %376 = vmatprep.subr.mxu0 %v333
        %377 = vmatpush1.msra.mxu0 %v332
        %378 = vmatprep.subr.mxu0 %v335
        %379 = vmatpush1.msra.mxu0 %v334
        %380 = vmatprep.subr.mxu0 %v337
        %381 = vmatpush1.msra.mxu0 %v336
        %382 = vmatprep.subr.mxu0 0.0
        %383 = vmatpush1.msra.mxu0 0.0
        %384 = vmatprep.subr.mxu0 0.0
        %385 = vmatpush1.msra.mxu0 0.0
        %386 = vmatprep.subr.mxu0 0.0
        %387 = vmatpush1.msra.mxu0 0.0
        %388 = vmatprep.subr.mxu0 0.0
        %389 = vmatpush1.msra.mxu0 0.0
        %390 = vmatprep.subr.mxu0 0.0
        %391 = vmatpush1.msra.mxu0 0.0
        %392 = vmatprep.subr.mxu0 0.0
        %393 = vmatpush1.msra.mxu0 0.0
        %394 = vmatprep.subr.mxu0 0.0
        %395 = vmatpush1.msra.mxu0 0.0
        %396 = vmatprep.subr.mxu0 0.0
        %397 = vmatpush1.msra.mxu0 0.0
        %398 = vmatprep.subr.mxu0 0.0
        %399 = vmatpush1.msra.mxu0 0.0
        %400 = vmatprep.subr.mxu0 0.0
        %401 = vmatpush1.msra.mxu0 0.0
        %402 = vmatprep.subr.mxu0 0.0
        %403 = vmatpush1.msra.mxu0 0.0
        %404 = vmatprep.subr.mxu0 0.0
        %405 = vmatpush1.msra.mxu0 0.0
        %406 = vmatprep.subr.mxu0 0.0
        %407 = vmatpush1.msra.mxu0 0.0
        %408 = vmatprep.subr.mxu0 0.0
        %409 = vmatpush1.msra.mxu0 0.0
        %410 = vmatprep.subr.mxu0 0.0
        %411 = vmatpush1.msra.mxu0 0.0
        %412 = vmatprep.subr.mxu0 0.0
        %413 = vmatpush1.msra.mxu0 0.0
        %414 = vmatprep.mubr.f32.mxu0 0.0
        %415 = vmatmul.mubr.f32.gmra.mrb[0].mxu0 %v274
        %v416 = vpop.f32.mrb[0].mxu0
        %v417 = vadd.f32 %v343, %v416
        %v418 = vpop.f32.mrb[0].mxu0
        %v419 = vadd.f32 %v347, %v418
        %420 = vmatprep.mubr.f32.mxu0 0.0
        %421 = vmatmul.mubr.f32.gmra.mrb[0].mxu0 %v275
        %v422 = vpop.f32.mrb[0].mxu0
        %v423 = vadd.f32 %v343, %v422
        %v424 = vpop.f32.mrb[0].mxu0
        %v425 = vadd.f32 %v347, %v424
        %426 = vmatprep.mubr.f32.mxu0 0.0
        %427 = vmatmul.mubr.f32.gmra.mrb[0].mxu0 %v276
        %v428 = vpop.f32.mrb[0].mxu0
        %v429 = vadd.f32 %v343, %v428
        %v430 = vpop.f32.mrb[0].mxu0
        %v431 = vadd.f32 %v347, %v430
        %432 = vmatprep.mubr.f32.mxu0 0.0
        %433 = vmatmul.mubr.f32.gmra.mrb[0].mxu0 %v277
        %v434 = vpop.f32.mrb[0].mxu0
        %v435 = vadd.f32 %v343, %v434
        %v436 = vpop.f32.mrb[0].mxu0
        %v437 = vadd.f32 %v347, %v436
        %438 = vmatprep.mubr.f32.mxu0 0.0
        %439 = vmatmul.mubr.f32.gmra.mrb[0].mxu0 %v278
        %v440 = vpop.f32.mrb[0].mxu0
        %v441 = vadd.f32 %v343, %v440
        %v442 = vpop.f32.mrb[0].mxu0
        %v443 = vadd.f32 %v347, %v442
        %444 = vmatprep.mubr.f32.mxu0 0.0
        %445 = vmatmul.mubr.f32.gmra.mrb[0].mxu0 %v279
        %v446 = vpop.f32.mrb[0].mxu0
        %v447 = vadd.f32 %v343, %v446
        %v448 = vpop.f32.mrb[0].mxu0
        %v449 = vadd.f32 %v347, %v448
        %450 = vmatprep.mubr.f32.mxu0 0.0
        %451 = vmatmul.mubr.f32.gmra.mrb[0].mxu0 %v280
        %v452 = vpop.f32.mrb[0].mxu0
        %v453 = vadd.f32 %v343, %v452
        %v454 = vpop.f32.mrb[0].mxu0
        %v455 = vadd.f32 %v347, %v454
        %456 = vmatprep.mubr.f32.mxu0 0.0
        %457 = vmatmul.mubr.f32.gmra.mrb[0].mxu0 %v281
        %v458 = vpop.f32.mrb[0].mxu0
        %v459 = vadd.f32 %v343, %v458
        %v460 = vpop.f32.mrb[0].mxu0
        %v461 = vadd.f32 %v347, %v460
        %462 = vmatprep.mubr.f32.mxu0 0.0
        %463 = vmatmul.mubr.f32.gmra.mrb[0].mxu0 %v282
        %v464 = vpop.f32.mrb[0].mxu0
        %v465 = vadd.f32 %v343, %v464
        %v466 = vpop.f32.mrb[0].mxu0
        %v467 = vadd.f32 %v347, %v466
        %468 = vmatprep.mubr.f32.mxu0 0.0
        %469 = vmatmul.mubr.f32.gmra.mrb[0].mxu0 %v283
        %v470 = vpop.f32.mrb[0].mxu0
        %v471 = vadd.f32 %v343, %v470
        %v472 = vpop.f32.mrb[0].mxu0
        %v473 = vadd.f32 %v347, %v472
        %474 = vmatprep.mubr.f32.mxu0 0.0
        %475 = vmatmul.mubr.f32.gmra.mrb[0].mxu0 %v284
        %v476 = vpop.f32.mrb[0].mxu0
        %v477 = vadd.f32 %v343, %v476
        %v478 = vpop.f32.mrb[0].mxu0
        %v479 = vadd.f32 %v347, %v478
        %480 = vmatprep.mubr.f32.mxu0 0.0
        %481 = vmatmul.mubr.f32.gmra.mrb[0].mxu0 %v285
        %v482 = vpop.f32.mrb[0].mxu0
        %v483 = vadd.f32 %v343, %v482
        %v484 = vpop.f32.mrb[0].mxu0
        %v485 = vadd.f32 %v347, %v484
        %486 = vmatprep.mubr.f32.mxu0 0.0
        %487 = vmatmul.mubr.f32.gmra.mrb[0].mxu0 %v286
        %v488 = vpop.f32.mrb[0].mxu0
        %v489 = vadd.f32 %v343, %v488
        %v490 = vpop.f32.mrb[0].mxu0
        %v491 = vadd.f32 %v347, %v490
        %492 = vmatprep.mubr.f32.mxu0 0.0
        %493 = vmatmul.mubr.f32.gmra.mrb[0].mxu0 %v287
        %v494 = vpop.f32.mrb[0].mxu0
        %v495 = vadd.f32 %v343, %v494
        %v496 = vpop.f32.mrb[0].mxu0
        %v497 = vadd.f32 %v347, %v496
        %498 = vmatprep.mubr.f32.mxu0 0.0
        %499 = vmatmul.mubr.f32.gmra.mrb[0].mxu0 %v288
        %v500 = vpop.f32.mrb[0].mxu0
        %v501 = vadd.f32 %v343, %v500
        %v502 = vpop.f32.mrb[0].mxu0
        %v503 = vadd.f32 %v347, %v502
        %504 = vmatprep.mubr.f32.mxu0 0.0
        %505 = vmatmul.mubr.f32.gmra.mrb[0].mxu0 %v289
        %v506 = vpop.f32.mrb[0].mxu0
        %v507 = vadd.f32 %v343, %v506
        %v508 = vpop.f32.mrb[0].mxu0
        %v509 = vadd.f32 %v347, %v508
        %510 = vmatprep.mubr.f32.mxu0 0.0
        %511 = vmatmul.mubr.f32.gmra.mrb[0].mxu0 %v290
        %v512 = vpop.f32.mrb[0].mxu0
        %v513 = vadd.f32 %v343, %v512
        %v514 = vpop.f32.mrb[0].mxu0
        %v515 = vadd.f32 %v347, %v514
        %516 = vmatprep.mubr.f32.mxu0 0.0
        %517 = vmatmul.mubr.f32.gmra.mrb[0].mxu0 %v291
        %v518 = vpop.f32.mrb[0].mxu0
        %v519 = vadd.f32 %v343, %v518
        %v520 = vpop.f32.mrb[0].mxu0
        %v521 = vadd.f32 %v347, %v520
        %522 = vmatprep.mubr.f32.mxu0 0.0
        %523 = vmatmul.mubr.f32.gmra.mrb[0].mxu0 %v292
        %v524 = vpop.f32.mrb[0].mxu0
        %v525 = vadd.f32 %v343, %v524
        %v526 = vpop.f32.mrb[0].mxu0
        %v527 = vadd.f32 %v347, %v526
        %528 = vmatprep.mubr.f32.mxu0 0.0
        %529 = vmatmul.mubr.f32.gmra.mrb[0].mxu0 %v293
        %v530 = vpop.f32.mrb[0].mxu0
        %v531 = vadd.f32 %v343, %v530
        %v532 = vpop.f32.mrb[0].mxu0
        %v533 = vadd.f32 %v347, %v532
        %534 = vmatprep.mubr.f32.mxu0 0.0
        %535 = vmatmul.mubr.f32.gmra.mrb[0].mxu0 %v294
        %v536 = vpop.f32.mrb[0].mxu0
        %v537 = vadd.f32 %v343, %v536
        %v538 = vpop.f32.mrb[0].mxu0
        %v539 = vadd.f32 %v347, %v538
        %540 = vmatprep.mubr.f32.mxu0 0.0
        %541 = vmatmul.mubr.f32.gmra.mrb[0].mxu0 %v295
        %v542 = vpop.f32.mrb[0].mxu0
        %v543 = vadd.f32 %v343, %v542
        %v544 = vpop.f32.mrb[0].mxu0
        %v545 = vadd.f32 %v347, %v544
        %546 = vmatprep.mubr.f32.mxu0 0.0
        %547 = vmatmul.mubr.f32.gmra.mrb[0].mxu0 %v296
        %v548 = vpop.f32.mrb[0].mxu0
        %v549 = vadd.f32 %v343, %v548
        %v550 = vpop.f32.mrb[0].mxu0
        %v551 = vadd.f32 %v347, %v550
        %552 = vmatprep.mubr.f32.mxu0 0.0
        %553 = vmatmul.mubr.f32.gmra.mrb[0].mxu0 %v297
        %v554 = vpop.f32.mrb[0].mxu0
        %v555 = vadd.f32 %v343, %v554
        %v556 = vpop.f32.mrb[0].mxu0
        %v557 = vadd.f32 %v347, %v556
        %558 = vmatprep.mubr.f32.mxu0 0.0
        %559 = vmatmul.mubr.f32.gmra.mrb[0].mxu0 %v298
        %v560 = vpop.f32.mrb[0].mxu0
        %v561 = vadd.f32 %v343, %v560
        %v562 = vpop.f32.mrb[0].mxu0
        %v563 = vadd.f32 %v347, %v562
        %564 = vmatprep.mubr.f32.mxu0 0.0
        %565 = vmatmul.mubr.f32.gmra.mrb[0].mxu0 %v299
        %v566 = vpop.f32.mrb[0].mxu0
        %v567 = vadd.f32 %v343, %v566
        %v568 = vpop.f32.mrb[0].mxu0
        %v569 = vadd.f32 %v347, %v568
        %570 = vmatprep.mubr.f32.mxu0 0.0
        %571 = vmatmul.mubr.f32.gmra.mrb[0].mxu0 %v300
        %v572 = vpop.f32.mrb[0].mxu0
        %v573 = vadd.f32 %v343, %v572
        %v574 = vpop.f32.mrb[0].mxu0
        %v575 = vadd.f32 %v347, %v574
        %576 = vmatprep.mubr.f32.mxu0 0.0
        %577 = vmatmul.mubr.f32.gmra.mrb[0].mxu0 %v301
        %v578 = vpop.f32.mrb[0].mxu0
        %v579 = vadd.f32 %v343, %v578
        %v580 = vpop.f32.mrb[0].mxu0
        %v581 = vadd.f32 %v347, %v580
        %582 = vmatprep.mubr.f32.mxu0 0.0
        %583 = vmatmul.mubr.f32.gmra.mrb[0].mxu0 %v302
        %v584 = vpop.f32.mrb[0].mxu0
        %v585 = vadd.f32 %v343, %v584
        %v586 = vpop.f32.mrb[0].mxu0
        %v587 = vadd.f32 %v347, %v586
        %588 = vmatprep.mubr.f32.mxu0 0.0
        %589 = vmatmul.mubr.f32.gmra.mrb[0].mxu0 %v303
        %v590 = vpop.f32.mrb[0].mxu0
        %v591 = vadd.f32 %v343, %v590
        %v592 = vpop.f32.mrb[0].mxu0
        %v593 = vadd.f32 %v347, %v592
        %594 = vmatprep.mubr.f32.mxu0 0.0
        %595 = vmatmul.mubr.f32.gmra.mrb[0].mxu0 %v304
        %v596 = vpop.f32.mrb[0].mxu0
        %v597 = vadd.f32 %v343, %v596
        %v598 = vpop.f32.mrb[0].mxu0
        %v599 = vadd.f32 %v347, %v598
        %600 = vmatprep.mubr.f32.mxu0 0.0
        %601 = vmatmul.mubr.f32.gmra.mrb[0].mxu0 %v305
        %v602 = vpop.f32.mrb[0].mxu0
        %v603 = vadd.f32 %v343, %v602
        %v604 = vpop.f32.mrb[0].mxu0
        %v605 = vadd.f32 %v347, %v604
        %606 = vdwg.mxu0
        %v607 = vld [vmem:[#allocation7] sm:$0xff]
        %v608 = vld [vmem:[#allocation7 + $0x8] sm:$0xff]
        %v609 = vld [vmem:[#allocation7 + $0x10] sm:$0xff]
        %v610 = vld [vmem:[#allocation7 + $0x18] sm:$0xff]
        %v611 = vld [vmem:[#allocation7 + $0x20] sm:$0xff]
        %v612 = vld [vmem:[#allocation7 + $0x28] sm:$0xff]
        %v613 = vld [vmem:[#allocation7 + $0x30] sm:$0xff]
        %v614 = vld [vmem:[#allocation7 + $0x38] sm:$0xff]
        %v615 = vld [vmem:[#allocation7 + $0x40] sm:$0xff]
        %v616 = vld [vmem:[#allocation7 + $0x48] sm:$0xff]
        %v617 = vld [vmem:[#allocation7 + $0x50] sm:$0xff]
        %v618 = vld [vmem:[#allocation7 + $0x58] sm:$0xff]
        %v619 = vld [vmem:[#allocation7 + $0x60] sm:$0xff]
        %v620 = vld [vmem:[#allocation7 + $0x68] sm:$0xff]
        %v621 = vld [vmem:[#allocation7 + $0x70] sm:$0xff]
        %v622 = vld [vmem:[#allocation7 + $0x78] sm:$0xff]
        %v623 = vld [vmem:[#allocation7 + $0x80] sm:$0xff]
        %v624 = vld [vmem:[#allocation7 + $0x88] sm:$0xff]
        %v625 = vld [vmem:[#allocation7 + $0x90] sm:$0xff]
        %v626 = vld [vmem:[#allocation7 + $0x98] sm:$0xff]
        %v627 = vld [vmem:[#allocation7 + $0xa0] sm:$0xff]
        %v628 = vld [vmem:[#allocation7 + $0xa8] sm:$0xff]
        %v629 = vld [vmem:[#allocation7 + $0xb0] sm:$0xff]
        %v630 = vld [vmem:[#allocation7 + $0xb8] sm:$0xff]
        %v631 = vld [vmem:[#allocation7 + $0xc0] sm:$0xff]
        %v632 = vld [vmem:[#allocation7 + $0xc8] sm:$0xff]
        %v633 = vld [vmem:[#allocation7 + $0xd0] sm:$0xff]
        %v634 = vld [vmem:[#allocation7 + $0xd8] sm:$0xff]
        %v635 = vld [vmem:[#allocation7 + $0xe0] sm:$0xff]
        %v636 = vld [vmem:[#allocation7 + $0xe8] sm:$0xff]
        %v637 = vld [vmem:[#allocation7 + $0xf0] sm:$0xff]
        %v638 = vld [vmem:[#allocation7 + $0xf8] sm:$0xff]
        %v639 = vld [vmem:[%s4] sm:$0x1]
        %v641 = vlaneseq
        %v642 = vshrl.u32 %v641, 7
        %v643 = vsub.s32 0, %v642
        %v644 = vrot.slane %v639, %v643
        %646 = vmatprep.subr.mxu0 0.0
        %647 = vmatpush1.msra.mxu0 %v607
        %648 = vmatprep.subr.mxu0 0.0
        %649 = vmatpush1.msra.mxu0 %v608
        %650 = vmatprep.subr.mxu0 0.0
        %651 = vmatpush1.msra.mxu0 %v609
        %652 = vmatprep.subr.mxu0 0.0
        %653 = vmatpush1.msra.mxu0 %v610
        %654 = vmatprep.subr.mxu0 0.0
        %655 = vmatpush1.msra.mxu0 %v611
        %656 = vmatprep.subr.mxu0 0.0
        %657 = vmatpush1.msra.mxu0 %v612
        %658 = vmatprep.subr.mxu0 0.0
        %659 = vmatpush1.msra.mxu0 %v613
        %660 = vmatprep.subr.mxu0 0.0
        %661 = vmatpush1.msra.mxu0 %v614
        %662 = vmatprep.subr.mxu0 0.0
        %663 = vmatpush1.msra.mxu0 %v615
        %664 = vmatprep.subr.mxu0 0.0
        %665 = vmatpush1.msra.mxu0 %v616
        %666 = vmatprep.subr.mxu0 0.0
        %667 = vmatpush1.msra.mxu0 %v617
        %668 = vmatprep.subr.mxu0 0.0
        %669 = vmatpush1.msra.mxu0 %v618
        %670 = vmatprep.subr.mxu0 0.0
        %671 = vmatpush1.msra.mxu0 %v619
        %672 = vmatprep.subr.mxu0 0.0
        %673 = vmatpush1.msra.mxu0 %v620
        %674 = vmatprep.subr.mxu0 0.0
        %675 = vmatpush1.msra.mxu0 %v621
        %676 = vmatprep.subr.mxu0 0.0
        %677 = vmatpush1.msra.mxu0 %v622
        %678 = vmatprep.subr.mxu0 0.0
        %679 = vmatpush1.msra.mxu0 %v623
        %680 = vmatprep.subr.mxu0 0.0
        %681 = vmatpush1.msra.mxu0 %v624
        %682 = vmatprep.subr.mxu0 0.0
        %683 = vmatpush1.msra.mxu0 %v625
        %684 = vmatprep.subr.mxu0 0.0
        %685 = vmatpush1.msra.mxu0 %v626
        %686 = vmatprep.subr.mxu0 0.0
        %687 = vmatpush1.msra.mxu0 %v627
        %688 = vmatprep.subr.mxu0 0.0
        %689 = vmatpush1.msra.mxu0 %v628
        %690 = vmatprep.subr.mxu0 0.0
        %691 = vmatpush1.msra.mxu0 %v629
        %692 = vmatprep.subr.mxu0 0.0
        %693 = vmatpush1.msra.mxu0 %v630
        %694 = vmatprep.subr.mxu0 0.0
        %695 = vmatpush1.msra.mxu0 %v631
        %696 = vmatprep.subr.mxu0 0.0
        %697 = vmatpush1.msra.mxu0 %v632
        %698 = vmatprep.subr.mxu0 0.0
        %699 = vmatpush1.msra.mxu0 %v633
        %700 = vmatprep.subr.mxu0 0.0
        %701 = vmatpush1.msra.mxu0 %v634
        %702 = vmatprep.subr.mxu0 0.0
        %703 = vmatpush1.msra.mxu0 %v635
        %704 = vmatprep.subr.mxu0 0.0
        %705 = vmatpush1.msra.mxu0 %v636
        %706 = vmatprep.subr.mxu0 0.0
        %707 = vmatpush1.msra.mxu0 %v637
        %708 = vmatprep.subr.mxu0 0.0
        %709 = vmatpush1.msra.mxu0 %v638
        %710 = vmatprep.mubr.f32.mxu0 %v419
        %711 = vmatmul.mubr.f32.gmra.mrb[0].mxu0 %v417
        %v712 = vpop.f32.mrb[0].mxu0
        %v713 = vadd.f32 %v644, %v712
        %v714 = vpop.f32.mrb[0].mxu0
        %715 = vmatprep.mubr.f32.mxu0 %v425
        %716 = vmatmul.mubr.f32.gmra.mrb[0].mxu0 %v423
        %v717 = vpop.f32.mrb[0].mxu0
        %v718 = vadd.f32 %v644, %v717
        %v719 = vpop.f32.mrb[0].mxu0
        %720 = vmatprep.mubr.f32.mxu0 %v431
        %721 = vmatmul.mubr.f32.gmra.mrb[0].mxu0 %v429
        %v722 = vpop.f32.mrb[0].mxu0
        %v723 = vadd.f32 %v644, %v722
        %v724 = vpop.f32.mrb[0].mxu0
        %725 = vmatprep.mubr.f32.mxu0 %v437
        %726 = vmatmul.mubr.f32.gmra.mrb[0].mxu0 %v435
        %v727 = vpop.f32.mrb[0].mxu0
        %v728 = vadd.f32 %v644, %v727
        %v729 = vpop.f32.mrb[0].mxu0
        %730 = vmatprep.mubr.f32.mxu0 %v443
        %731 = vmatmul.mubr.f32.gmra.mrb[0].mxu0 %v441
        %v732 = vpop.f32.mrb[0].mxu0
        %v733 = vadd.f32 %v644, %v732
        %v734 = vpop.f32.mrb[0].mxu0
        %735 = vmatprep.mubr.f32.mxu0 %v449
        %736 = vmatmul.mubr.f32.gmra.mrb[0].mxu0 %v447
        %v737 = vpop.f32.mrb[0].mxu0
        %v738 = vadd.f32 %v644, %v737
        %v739 = vpop.f32.mrb[0].mxu0
        %740 = vmatprep.mubr.f32.mxu0 %v455
        %741 = vmatmul.mubr.f32.gmra.mrb[0].mxu0 %v453
        %v742 = vpop.f32.mrb[0].mxu0
        %v743 = vadd.f32 %v644, %v742
        %v744 = vpop.f32.mrb[0].mxu0
        %745 = vmatprep.mubr.f32.mxu0 %v461
        %746 = vmatmul.mubr.f32.gmra.mrb[0].mxu0 %v459
        %v747 = vpop.f32.mrb[0].mxu0
        %v748 = vadd.f32 %v644, %v747
        %v749 = vpop.f32.mrb[0].mxu0
        %750 = vmatprep.mubr.f32.mxu0 %v467
        %751 = vmatmul.mubr.f32.gmra.mrb[0].mxu0 %v465
        %v752 = vpop.f32.mrb[0].mxu0
        %v753 = vadd.f32 %v644, %v752
        %v754 = vpop.f32.mrb[0].mxu0
        %755 = vmatprep.mubr.f32.mxu0 %v473
        %756 = vmatmul.mubr.f32.gmra.mrb[0].mxu0 %v471
        %v757 = vpop.f32.mrb[0].mxu0
        %v758 = vadd.f32 %v644, %v757
        %v759 = vpop.f32.mrb[0].mxu0
        %760 = vmatprep.mubr.f32.mxu0 %v479
        %761 = vmatmul.mubr.f32.gmra.mrb[0].mxu0 %v477
        %v762 = vpop.f32.mrb[0].mxu0
        %v763 = vadd.f32 %v644, %v762
        %v764 = vpop.f32.mrb[0].mxu0
        %765 = vmatprep.mubr.f32.mxu0 %v485
        %766 = vmatmul.mubr.f32.gmra.mrb[0].mxu0 %v483
        %v767 = vpop.f32.mrb[0].mxu0
        %v768 = vadd.f32 %v644, %v767
        %v769 = vpop.f32.mrb[0].mxu0
        %770 = vmatprep.mubr.f32.mxu0 %v491
        %771 = vmatmul.mubr.f32.gmra.mrb[0].mxu0 %v489
        %v772 = vpop.f32.mrb[0].mxu0
        %v773 = vadd.f32 %v644, %v772
        %v774 = vpop.f32.mrb[0].mxu0
        %775 = vmatprep.mubr.f32.mxu0 %v497
        %776 = vmatmul.mubr.f32.gmra.mrb[0].mxu0 %v495
        %v777 = vpop.f32.mrb[0].mxu0
        %v778 = vadd.f32 %v644, %v777
        %v779 = vpop.f32.mrb[0].mxu0
        %780 = vmatprep.mubr.f32.mxu0 %v503
        %781 = vmatmul.mubr.f32.gmra.mrb[0].mxu0 %v501
        %v782 = vpop.f32.mrb[0].mxu0
        %v783 = vadd.f32 %v644, %v782
        %v784 = vpop.f32.mrb[0].mxu0
        %785 = vmatprep.mubr.f32.mxu0 %v509
        %786 = vmatmul.mubr.f32.gmra.mrb[0].mxu0 %v507
        %v787 = vpop.f32.mrb[0].mxu0
        %v788 = vadd.f32 %v644, %v787
        %v789 = vpop.f32.mrb[0].mxu0
        %790 = vmatprep.mubr.f32.mxu0 %v515
        %791 = vmatmul.mubr.f32.gmra.mrb[0].mxu0 %v513
        %v792 = vpop.f32.mrb[0].mxu0
        %v793 = vadd.f32 %v644, %v792
        %v794 = vpop.f32.mrb[0].mxu0
        %795 = vmatprep.mubr.f32.mxu0 %v521
        %796 = vmatmul.mubr.f32.gmra.mrb[0].mxu0 %v519
        %v797 = vpop.f32.mrb[0].mxu0
        %v798 = vadd.f32 %v644, %v797
        %v799 = vpop.f32.mrb[0].mxu0
        %800 = vmatprep.mubr.f32.mxu0 %v527
        %801 = vmatmul.mubr.f32.gmra.mrb[0].mxu0 %v525
        %v802 = vpop.f32.mrb[0].mxu0
        %v803 = vadd.f32 %v644, %v802
        %v804 = vpop.f32.mrb[0].mxu0
        %805 = vmatprep.mubr.f32.mxu0 %v533
        %806 = vmatmul.mubr.f32.gmra.mrb[0].mxu0 %v531
        %v807 = vpop.f32.mrb[0].mxu0
        %v808 = vadd.f32 %v644, %v807
        %v809 = vpop.f32.mrb[0].mxu0
        %810 = vmatprep.mubr.f32.mxu0 %v539
        %811 = vmatmul.mubr.f32.gmra.mrb[0].mxu0 %v537
        %v812 = vpop.f32.mrb[0].mxu0
        %v813 = vadd.f32 %v644, %v812
        %v814 = vpop.f32.mrb[0].mxu0
        %815 = vmatprep.mubr.f32.mxu0 %v545
        %816 = vmatmul.mubr.f32.gmra.mrb[0].mxu0 %v543
        %v817 = vpop.f32.mrb[0].mxu0
        %v818 = vadd.f32 %v644, %v817
        %v819 = vpop.f32.mrb[0].mxu0
        %820 = vmatprep.mubr.f32.mxu0 %v551
        %821 = vmatmul.mubr.f32.gmra.mrb[0].mxu0 %v549
        %v822 = vpop.f32.mrb[0].mxu0
        %v823 = vadd.f32 %v644, %v822
        %v824 = vpop.f32.mrb[0].mxu0
        %825 = vmatprep.mubr.f32.mxu0 %v557
        %826 = vmatmul.mubr.f32.gmra.mrb[0].mxu0 %v555
        %v827 = vpop.f32.mrb[0].mxu0
        %v828 = vadd.f32 %v644, %v827
        %v829 = vpop.f32.mrb[0].mxu0
        %830 = vmatprep.mubr.f32.mxu0 %v563
        %831 = vmatmul.mubr.f32.gmra.mrb[0].mxu0 %v561
        %v832 = vpop.f32.mrb[0].mxu0
        %v833 = vadd.f32 %v644, %v832
        %v834 = vpop.f32.mrb[0].mxu0
        %835 = vmatprep.mubr.f32.mxu0 %v569
        %836 = vmatmul.mubr.f32.gmra.mrb[0].mxu0 %v567
        %v837 = vpop.f32.mrb[0].mxu0
        %v838 = vadd.f32 %v644, %v837
        %v839 = vpop.f32.mrb[0].mxu0
        %840 = vmatprep.mubr.f32.mxu0 %v575
        %841 = vmatmul.mubr.f32.gmra.mrb[0].mxu0 %v573
        %v842 = vpop.f32.mrb[0].mxu0
        %v843 = vadd.f32 %v644, %v842
        %v844 = vpop.f32.mrb[0].mxu0
        %845 = vmatprep.mubr.f32.mxu0 %v581
        %846 = vmatmul.mubr.f32.gmra.mrb[0].mxu0 %v579
        %v847 = vpop.f32.mrb[0].mxu0
        %v848 = vadd.f32 %v644, %v847
        %v849 = vpop.f32.mrb[0].mxu0
        %850 = vmatprep.mubr.f32.mxu0 %v587
        %851 = vmatmul.mubr.f32.gmra.mrb[0].mxu0 %v585
        %v852 = vpop.f32.mrb[0].mxu0
        %v853 = vadd.f32 %v644, %v852
        %v854 = vpop.f32.mrb[0].mxu0
        %855 = vmatprep.mubr.f32.mxu0 %v593
        %856 = vmatmul.mubr.f32.gmra.mrb[0].mxu0 %v591
        %v857 = vpop.f32.mrb[0].mxu0
        %v858 = vadd.f32 %v644, %v857
        %v859 = vpop.f32.mrb[0].mxu0
        %860 = vmatprep.mubr.f32.mxu0 %v599
        %861 = vmatmul.mubr.f32.gmra.mrb[0].mxu0 %v597
        %v862 = vpop.f32.mrb[0].mxu0
        %v863 = vadd.f32 %v644, %v862
        %v864 = vpop.f32.mrb[0].mxu0
        %865 = vmatprep.mubr.f32.mxu0 %v605
        %866 = vmatmul.mubr.f32.gmra.mrb[0].mxu0 %v603
        %v867 = vpop.f32.mrb[0].mxu0
        %v868 = vadd.f32 %v644, %v867
        %v869 = vpop.f32.mrb[0].mxu0
        %870 = vdwg.mxu0
        %871 = vst [vmem:[%s271] sm:$0xff] %v713
        %872 = vst [vmem:[%s271 + $0x8] sm:$0xff] %v718
        %873 = vst [vmem:[%s271 + $0x10] sm:$0xff] %v723
        %874 = vst [vmem:[%s271 + $0x18] sm:$0xff] %v728
        %875 = vst [vmem:[%s271 + $0x20] sm:$0xff] %v733
        %876 = vst [vmem:[%s271 + $0x28] sm:$0xff] %v738
        %877 = vst [vmem:[%s271 + $0x30] sm:$0xff] %v743
        %878 = vst [vmem:[%s271 + $0x38] sm:$0xff] %v748
        %879 = vst [vmem:[%s271 + $0x40] sm:$0xff] %v753
        %880 = vst [vmem:[%s271 + $0x48] sm:$0xff] %v758
        %881 = vst [vmem:[%s271 + $0x50] sm:$0xff] %v763
        %882 = vst [vmem:[%s271 + $0x58] sm:$0xff] %v768
        %883 = vst [vmem:[%s271 + $0x60] sm:$0xff] %v773
        %884 = vst [vmem:[%s271 + $0x68] sm:$0xff] %v778
        %885 = vst [vmem:[%s271 + $0x70] sm:$0xff] %v783
        %886 = vst [vmem:[%s271 + $0x78] sm:$0xff] %v788
        %887 = vst [vmem:[%s271 + $0x80] sm:$0xff] %v793
        %888 = vst [vmem:[%s271 + $0x88] sm:$0xff] %v798
        %889 = vst [vmem:[%s271 + $0x90] sm:$0xff] %v803
        %890 = vst [vmem:[%s271 + $0x98] sm:$0xff] %v808
        %891 = vst [vmem:[%s271 + $0xa0] sm:$0xff] %v813
        %892 = vst [vmem:[%s271 + $0xa8] sm:$0xff] %v818
        %893 = vst [vmem:[%s271 + $0xb0] sm:$0xff] %v823
        %894 = vst [vmem:[%s271 + $0xb8] sm:$0xff] %v828
        %895 = vst [vmem:[%s271 + $0xc0] sm:$0xff] %v833
        %896 = vst [vmem:[%s271 + $0xc8] sm:$0xff] %v838
        %897 = vst [vmem:[%s271 + $0xd0] sm:$0xff] %v843
        %898 = vst [vmem:[%s271 + $0xd8] sm:$0xff] %v848
        %899 = vst [vmem:[%s271 + $0xe0] sm:$0xff] %v853
        %900 = vst [vmem:[%s271 + $0xe8] sm:$0xff] %v858
        %901 = vst [vmem:[%s271 + $0xf0] sm:$0xff] %v863
        %902 = vst [vmem:[%s271 + $0xf8] sm:$0xff] %v868
        %s903 = sand.u32 %s141, 1
        %s904 = scalar_lea.sflag [#allocation4], %s903
        %s905 = sand.u32 %s141, 1
        %s906 = smul.addr %s905, 256
        %s907 = scalar_lea.vmem [#allocation8], %s906
        // Predicated region
        $region53: #{tpu_custom_call.1} parent=39 // pred_check
          %p908 = pneg %p151
        $region54: #{tpu_custom_call.1} parent=39 // pred_check_branch
          %910 = sbr.rel (%p908) target = $region56
        $region55: #{tpu_custom_call.1} parent=39 // pred_region
          %s911 = smul.u32 32, %s23
          %s913 = ssub.s32 4096, 4096
          %914 = vsyncadd %s904, %s913
          %s915 = smul.addr %s911, 128
          %s916 = scalar_lea.hbm %s5, %s915
          %s917 = sshll.u32 %s907, 4
          %s918 = int_to_ptr.vmem [resolvable:$true] %s917
          %923 = dma.vmem_to_hbm [thread:$0]  %s918, 4096, %s916, %s904, 128, 128, 8
        $region56: #{tpu_custom_call.1} parent=39 // pred_fallthru
          _
      $region40: #{tpu_custom_call.1} parent=5 // pred_fallthru
        _
      %p924 = scmp.le.s32.totalorder 2, %s18
      // Predicated region
      $region57: #{tpu_custom_call.1} parent=5 // pred_check
        %p925 = pneg %p924
      $region58: #{tpu_custom_call.1} parent=5 // pred_check_branch
        %927 = sbr.rel (%p925) target = $region60
      $region59: #{tpu_custom_call.1} parent=5 // pred_region
        %s928 = ssub.s32 %s18, 2
        // Predicated region
        $region61: #{tpu_custom_call.1} parent=59 // pred_check
          %p929 = pneg %p157
        $region62: #{tpu_custom_call.1} parent=59 // pred_check_branch
          %931 = sbr.rel (%p929) target = $region64
        $region63: #{tpu_custom_call.1} parent=59 // pred_region
          %s932 = sand.u32 %s142, 1
          %s933 = scalar_lea.sflag [#allocation4], %s932
          %s934 = sand.u32 %s142, 1
          %s935 = smul.addr %s934, 256
          %s936 = scalar_lea.vmem [#allocation8], %s935
          %937 = dma.done %s933, 4096
        $region64: #{tpu_custom_call.1} parent=59 // pred_fallthru
          _
      $region60: #{tpu_custom_call.1} parent=5 // pred_fallthru
        _
    $region6: #{tpu_custom_call.1} parent=1 // loop_footer
      %s22 = sadd.s32 1, %s18
    $region7: #{tpu_custom_call.1} parent=1 // loop_footer_branch
      %17 = sbr.rel target = $region3
    $region8: #{tpu_custom_call.1} parent=1 // loop_exit
      _
    %938 = vsyncpa [#allocation3], 1
    %s939 = scalar_lea.sflag [#allocation3], 1
    %940 = vsyncpa %s939, 1
    %941 = vsyncpa [#allocation6], 1
    %942 = vsyncpa [#allocation4], 1
    %s943 = scalar_lea.sflag [#allocation4], 1
    %944 = vsyncpa %s943, 1

</llo_original>
